<compile_context>
chip_gen: v7x
topology: tpu7x:2x2x1
jax: 0.10.0
libtpu: 0.0.40
codegen_flags: <defaults>
</compile_context>

<pallas_src>
import functools
import math

import jax
import jax.numpy as jnp
from jax import lax
from jax.experimental import pallas as pl
from jax.experimental.pallas import tpu as pltpu


def _round_up(x, m):
    return ((x + m - 1) // m) * m


def _kernel_body(x_ref, w_ref, xb_ref, a_ref, bias_ref, o_ref, acc_ref, *, scale):
    # x_ref:    (tm, tk)        activations tile
    # w_ref:    (tn, tk)        weight tile in native (out, in) layout
    # xb_ref:   (tm, r_pad)     precomputed x @ b^T tile (rank zero-padded)
    # a_ref:    (tn, r_pad)     LoRA "a" tile in native (out, r) layout
    # bias_ref: (1, tn) or None
    # o_ref:    (tm, tn)
    # acc_ref:  (tm, tn) f32 scratch — base GEMM accumulator over K
    k = pl.program_id(2)

    @pl.when(k == 0)
    def _init():
        acc_ref[...] = jnp.zeros_like(acc_ref)

    # Base GEMM: contract last dims of x (tm, tk) and W (tn, tk).  The MXU
    # consumes the transposed operand directly; no W^T copy is materialized.
    acc_ref[...] += lax.dot_general(
        x_ref[...], w_ref[...],
        dimension_numbers=(((1,), (1,)), ((), ())),
        preferred_element_type=jnp.float32)

    @pl.when(k == pl.num_programs(2) - 1)
    def _finalize():
        # LoRA up-projection: xb (tm, r_pad) @ a (tn, r_pad)^T -> (tm, tn).
        lora = lax.dot_general(
            xb_ref[...], a_ref[...],
            dimension_numbers=(((1,), (1,)), ((), ())),
            preferred_element_type=jnp.float32)
        out = acc_ref[...] + lora * scale
        if bias_ref is not None:
            out = out + bias_ref[...].astype(jnp.float32)
        o_ref[...] = out.astype(o_ref.dtype)


def _make_kernel(scale, has_bias):
    if has_bias:
        def kernel(x_ref, w_ref, xb_ref, a_ref, bias_ref, o_ref, acc_ref):
            _kernel_body(x_ref, w_ref, xb_ref, a_ref, bias_ref, o_ref, acc_ref,
                         scale=scale)
    else:
        def kernel(x_ref, w_ref, xb_ref, a_ref, o_ref, acc_ref):
            _kernel_body(x_ref, w_ref, xb_ref, a_ref, None, o_ref, acc_ref,
                         scale=scale)
    return kernel


def lora_linear(x, weight, a, b, bias=None, *, alpha=32, rank=None):
    """x: (..., in); weight: (out, in); a: (out, r); b: (r, in); bias: (out,) or None."""
    out_features, in_features = weight.shape
    if rank is None:
        rank = b.shape[0]
    scale = float(alpha) / float(rank)

    lead = x.shape[:-1]
    m = math.prod(lead) if lead else 1
    x2d = x.reshape(m, in_features)
    dtype = x.dtype
    itemsize = jnp.dtype(dtype).itemsize

    # LoRA down-projection hoisted out of the kernel: it only depends on the
    # M/K axes, so recomputing it per N tile inside the grid is pure waste.
    # It is an (m, rank) sliver -> a tiny XLA matmul.
    xb = jnp.dot(x2d, b.T, preferred_element_type=jnp.float32).astype(a.dtype)

    # Sublane minimum for the I/O dtype (8 f32, 16 bf16, 32 int8/fp8).
    sub_min = max(8, 32 // itemsize)
    tm_cap = 1024 if itemsize <= 2 else 512
    tm = min(tm_cap, _round_up(max(m, 1), sub_min))
    tn = min(512, _round_up(out_features, 128))
    tk = min(512, _round_up(in_features, 128))
    r_pad = _round_up(max(rank, 1), 128)

    m_pad = _round_up(m, tm)
    n_pad = _round_up(out_features, tn)
    k_pad = _round_up(in_features, tk)

    # Zero-padding is semantics-preserving (padded rows/cols are sliced off;
    # padded K/rank columns multiply zero activations).  Skip every pad that
    # is not needed so aligned shapes take a zero-copy path.
    if (m_pad, k_pad) != (m, in_features):
        x2d = jnp.pad(x2d, ((0, m_pad - m), (0, k_pad - in_features)))
    w = weight
    if (n_pad, k_pad) != (out_features, in_features):
        w = jnp.pad(weight, ((0, n_pad - out_features), (0, k_pad - in_features)))
    if (m_pad, r_pad) != (m, rank):
        xb = jnp.pad(xb, ((0, m_pad - m), (0, r_pad - rank)))
    a_p = a
    if (n_pad, r_pad) != (out_features, rank):
        a_p = jnp.pad(a, ((0, n_pad - out_features), (0, r_pad - rank)))

    has_bias = bias is not None
    inputs = [x2d, w, xb, a_p]
    in_specs = [
        pl.BlockSpec((tm, tk), lambda i, j, k: (i, k)),      # x tile
        pl.BlockSpec((tn, tk), lambda i, j, k: (j, k)),      # W tile (native layout)
        pl.BlockSpec((tm, r_pad), lambda i, j, k: (i, 0)),   # x @ b^T tile
        pl.BlockSpec((tn, r_pad), lambda i, j, k: (j, 0)),   # a tile (native layout)
    ]
    if has_bias:
        bias2d = bias.reshape(1, out_features)
        if n_pad != out_features:
            bias2d = jnp.pad(bias2d, ((0, 0), (0, n_pad - out_features)))
        inputs.append(bias2d)
        in_specs.append(pl.BlockSpec((1, tn), lambda i, j, k: (0, j)))

    # VMEM budget: double-buffered inputs + output + f32 accumulator, with
    # ~50% headroom, capped at 64 MiB so the plan also fits v7x.
    vmem_est = (
        2 * itemsize * (tm * tk + tn * tk + tm * r_pad + tn * r_pad
                        + (tn if has_bias else 0))
        + 2 * itemsize * tm * tn
        + 4 * tm * tn)
    vmem_limit = int(min(64 * 1024 * 1024,
                         max(32 * 1024 * 1024, int(vmem_est * 1.5))))

    cost = pl.CostEstimate(
        flops=2 * m_pad * k_pad * n_pad + 2 * m_pad * r_pad * n_pad,
        transcendentals=0,
        bytes_accessed=int(itemsize * (
            (m_pad // tm) * n_pad * k_pad            # W re-streamed once per M tile
            + m_pad * k_pad + m_pad * r_pad + n_pad * r_pad
            + (n_pad if has_bias else 0) + m_pad * n_pad)),
    )

    out2d = pl.pallas_call(
        _make_kernel(scale, has_bias),
        out_shape=jax.ShapeDtypeStruct((m_pad, n_pad), dtype),
        grid_spec=pltpu.PrefetchScalarGridSpec(
            num_scalar_prefetch=0,
            grid=(m_pad // tm, n_pad // tn, k_pad // tk),
            in_specs=in_specs,
            out_specs=pl.BlockSpec((tm, tn), lambda i, j, k: (i, j)),
            scratch_shapes=[pltpu.VMEM((tm, tn), jnp.float32)],
        ),
        compiler_params=pltpu.CompilerParams(
            dimension_semantics=("parallel", "parallel", "arbitrary"),
            vmem_limit_bytes=vmem_limit),
        cost_estimate=cost,
    )(*inputs)

    if (m_pad, n_pad) != (m, out_features):
        out2d = out2d[:m, :out_features]
    return out2d.reshape(*lead, out_features)


if __name__ == "__main__":
    key = jax.random.PRNGKey(0)
    k_x, k_w, k_a, k_b, k_bias = jax.random.split(key, 5)

    batch, seq = 2, 8
    in_features, out_features, rank, alpha = 32, 32, 8, 32

    x = jax.random.normal(k_x, (batch, seq, in_features), dtype=jnp.float32)

    # Deterministic synthetic parameters (module shapes).  Note: the module's
    # reset_parameters() zeros `b`; small random values are used so the LoRA
    # path contributes non-trivially (pure synthetic init, not a checkpoint).
    weight = jax.random.normal(k_w, (out_features, in_features), dtype=jnp.float32) * 0.05
    a = jax.random.normal(k_a, (out_features, rank), dtype=jnp.float32) * 0.02
    b = jax.random.normal(k_b, (rank, in_features), dtype=jnp.float32) * 0.02
    bias = jax.random.normal(k_bias, (out_features,), dtype=jnp.float32) * 0.1

    # With bias.
    out = lora_linear(x, weight, a, b, bias, alpha=alpha, rank=rank)
    out = jax.block_until_ready(out)
    ref = (x @ weight.T + bias) + (x @ (a @ b).T) * alpha / rank
    assert out.shape == ref.shape
    assert jnp.allclose(out, ref, atol=1e-4, rtol=1e-4), "mismatch vs reference (bias)"

    # Without bias (exercises the no-bias kernel variant, bias=False in the module).
    out_nb = lora_linear(x, weight, a, b, None, alpha=alpha, rank=rank)
    out_nb = jax.block_until_ready(out_nb)
    ref_nb = (x @ weight.T) + (x @ (a @ b).T) * alpha / rank
    assert jnp.allclose(out_nb, ref_nb, atol=1e-4, rtol=1e-4), "mismatch vs reference (no bias)"

    print("KERNEL_OK")
</pallas_src>

<mosaic_0001>
module attributes {stable_mosaic.version = 11 : i64} {
  func.func @kernel(%arg0: i32, %arg1: i32, %arg2: i32, %arg3: memref<16x128xf32, #tpu.memory_space<vmem>>, %arg4: memref<128x128xf32, #tpu.memory_space<vmem>>, %arg5: memref<16x128xf32, #tpu.memory_space<vmem>>, %arg6: memref<128x128xf32, #tpu.memory_space<vmem>>, %arg7: memref<1x128xf32, #tpu.memory_space<vmem>>, %arg8: memref<16x128xf32, #tpu.memory_space<vmem>>, %arg9: memref<16x128xf32, #tpu.memory_space<vmem>>) attributes {dimension_semantics = [#tpu.dimension_semantics<parallel>, #tpu.dimension_semantics<parallel>, #tpu.dimension_semantics<arbitrary>], iteration_bounds = array<i64: 1, 1, 1>, scalar_prefetch = 0 : i64, scratch_operands = 1 : i64, tpu.core_type = #tpu.core_type<tc>, window_params = [{transform_indices = @transform_0, window_bounds = array<i64: 16, 128>}, {transform_indices = @transform_1, window_bounds = array<i64: 128, 128>}, {transform_indices = @transform_2, window_bounds = array<i64: 16, 128>}, {transform_indices = @transform_3, window_bounds = array<i64: 128, 128>}, {transform_indices = @transform_4, window_bounds = array<i64: 1, 128>}, {transform_indices = @transform_5, window_bounds = array<i64: 16, 128>}]} {
    %c0_i32 = arith.constant 0 : i32
    %0 = arith.cmpi eq, %arg2, %c0_i32 : i32
    %1 = arith.extui %0 : i1 to i32
    %c0_i32_0 = arith.constant 0 : i32
    %2 = arith.cmpi ne, %1, %c0_i32_0 : i32
    scf.if %2 {
      %cst_10 = arith.constant 0.000000e+00 : f32
      %12 = vector.broadcast %cst_10 : f32 to vector<16x128xf32>
      %c0_11 = arith.constant 0 : index
      %c0_12 = arith.constant 0 : index
      %13 = vector.load %arg9[%c0_11, %c0_12] : memref<16x128xf32, #tpu.memory_space<vmem>>, vector<16x128xf32>
      tpu.vector_store %arg9[%c0_11, %c0_12], %12 {strides = array<i32>} : memref<16x128xf32, #tpu.memory_space<vmem>>, vector<16x128xf32>,
    } else {
    }
    %c0 = arith.constant 0 : index
    %c0_1 = arith.constant 0 : index
    %3 = vector.load %arg9[%c0, %c0_1] : memref<16x128xf32, #tpu.memory_space<vmem>>, vector<16x128xf32>
    %c0_2 = arith.constant 0 : index
    %c0_3 = arith.constant 0 : index
    %4 = vector.load %arg3[%c0_2, %c0_3] : memref<16x128xf32, #tpu.memory_space<vmem>>, vector<16x128xf32>
    %c0_4 = arith.constant 0 : index
    %c0_5 = arith.constant 0 : index
    %5 = vector.load %arg4[%c0_4, %c0_5] : memref<128x128xf32, #tpu.memory_space<vmem>>, vector<128x128xf32>
    %cst = arith.constant dense<0.000000e+00> : vector<16x128xf32>
    %6 = tpu.matmul %4, %5, %cst {dimension_numbers = #tpu.dot_dimension_numbers<[1], [1], [0], [0], [0, 0, 1, 0], [], []>} : vector<16x128xf32>, vector<128x128xf32>, vector<16x128xf32> -> vector<16x128xf32>
    %7 = arith.addf %3, %6 : vector<16x128xf32>
    %c0_6 = arith.constant 0 : index
    %c0_7 = arith.constant 0 : index
    %8 = vector.load %arg9[%c0_6, %c0_7] : memref<16x128xf32, #tpu.memory_space<vmem>>, vector<16x128xf32>
    tpu.vector_store %arg9[%c0_6, %c0_7], %7 {strides = array<i32>} : memref<16x128xf32, #tpu.memory_space<vmem>>, vector<16x128xf32>,
    %c0_i32_8 = arith.constant 0 : i32
    %9 = arith.cmpi eq, %arg2, %c0_i32_8 : i32
    %10 = arith.extui %9 : i1 to i32
    %c0_i32_9 = arith.constant 0 : i32
    %11 = arith.cmpi ne, %10, %c0_i32_9 : i32
    scf.if %11 {
      %c0_10 = arith.constant 0 : index
      %c0_11 = arith.constant 0 : index
      %12 = vector.load %arg5[%c0_10, %c0_11] : memref<16x128xf32, #tpu.memory_space<vmem>>, vector<16x128xf32>
      %c0_12 = arith.constant 0 : index
      %c0_13 = arith.constant 0 : index
      %13 = vector.load %arg6[%c0_12, %c0_13] : memref<128x128xf32, #tpu.memory_space<vmem>>, vector<128x128xf32>
      %cst_14 = arith.constant dense<0.000000e+00> : vector<16x128xf32>
      %14 = tpu.matmul %12, %13, %cst_14 {dimension_numbers = #tpu.dot_dimension_numbers<[1], [1], [0], [0], [0, 0, 1, 0], [], []>} : vector<16x128xf32>, vector<128x128xf32>, vector<16x128xf32> -> vector<16x128xf32>
      %c0_15 = arith.constant 0 : index
      %c0_16 = arith.constant 0 : index
      %15 = vector.load %arg9[%c0_15, %c0_16] : memref<16x128xf32, #tpu.memory_space<vmem>>, vector<16x128xf32>
      %cst_17 = arith.constant 4.000000e+00 : f32
      %16 = vector.broadcast %cst_17 : f32 to vector<16x128xf32>
      %17 = arith.mulf %14, %16 : vector<16x128xf32>
      %18 = arith.addf %15, %17 : vector<16x128xf32>
      %c0_18 = arith.constant 0 : index
      %c0_19 = arith.constant 0 : index
      %19 = vector.load %arg7[%c0_18, %c0_19] : memref<1x128xf32, #tpu.memory_space<vmem>>, vector<1x128xf32>
      %20 = vector.broadcast %19 : vector<1x128xf32> to vector<16x128xf32>
      %21 = arith.addf %18, %20 : vector<16x128xf32>
      %c0_20 = arith.constant 0 : index
      %c0_21 = arith.constant 0 : index
      %22 = vector.load %arg8[%c0_20, %c0_21] : memref<16x128xf32, #tpu.memory_space<vmem>>, vector<16x128xf32>
      tpu.vector_store %arg8[%c0_20, %c0_21], %21 {strides = array<i32>} : memref<16x128xf32, #tpu.memory_space<vmem>>, vector<16x128xf32>,
    } else {
    }
    return
  }
  func.func @transform_0(%arg0: i32, %arg1: i32, %arg2: i32) -> (i32, i32) {
    %c0_i32 = arith.constant 0 : i32
    return %arg0, %arg2 : i32, i32
  }
  func.func @transform_1(%arg0: i32, %arg1: i32, %arg2: i32) -> (i32, i32) {
    %c0_i32 = arith.constant 0 : i32
    return %arg1, %arg2 : i32, i32
  }
  func.func @transform_2(%arg0: i32, %arg1: i32, %arg2: i32) -> (i32, i32) {
    %c0_i32 = arith.constant 0 : i32
    %c0_i32_0 = arith.constant 0 : i32
    return %arg0, %c0_i32 : i32, i32
  }
  func.func @transform_3(%arg0: i32, %arg1: i32, %arg2: i32) -> (i32, i32) {
    %c0_i32 = arith.constant 0 : i32
    %c0_i32_0 = arith.constant 0 : i32
    return %arg1, %c0_i32 : i32, i32
  }
  func.func @transform_4(%arg0: i32, %arg1: i32, %arg2: i32) -> (i32, i32) {
    %c0_i32 = arith.constant 0 : i32
    %c0_i32_0 = arith.constant 0 : i32
    return %c0_i32, %arg1 : i32, i32
  }
  func.func @transform_5(%arg0: i32, %arg1: i32, %arg2: i32) -> (i32, i32) {
    %c0_i32 = arith.constant 0 : i32
    return %arg0, %arg1 : i32, i32
  }
}

</mosaic_0001>

<llo_original>
// kernel: tpu_custom_call.1
$region0: #{tpu_custom_call.1}
  #allocation0 [shape = 'u32[]', space=smem, size = 0x4, offset = 0x4, fixed_abs, tag = 'smem constant byte address 0x4 - core index']
  #allocation1 [shape = 'u32[144,128]{1,0:T(1,128)}', space=vmem, size = 0x12000, scoped, tag = 'internal scratch']
  #allocation2 [shape = 'f32[16,128]{1,0:T(8,128)}', space=vmem, size = 0x2000, scoped, tag = 'scratch operand']
  %s0 = inlined_call_operand.hbm [shape: f32[16,128], index: 0, kind: input, shape index: {}]
  %s1 = inlined_call_operand.hbm [shape: f32[128,128], index: 1, kind: input, shape index: {}]
  %s2 = inlined_call_operand.hbm [shape: f32[16,128], index: 2, kind: input, shape index: {}]
  %s3 = inlined_call_operand.hbm [shape: f32[128,128], index: 3, kind: input, shape index: {}]
  %s4 = inlined_call_operand.vmem [shape: f32[1,128], index: 4, kind: input, shape index: {}]
  %s5 = inlined_call_operand.hbm [shape: f32[16,128], index: 5, kind: output, shape index: {}]
  %s6 = sld [smem:[#allocation0]]
  $region54: #{tpu_custom_call.1} parent=0
    _
  %s8 = ssub.s32 1, %s6
  %s9 = scalar_select 0, %s8, %s6
  $region1: #{tpu_custom_call.1} parent=0
    #allocation3 [shape = 'u8[8192]{0}', space=vmem, size = 0x2000, scoped, tag = 'input window, operand 0, single buffered']
    #allocation4 [shape = 's32[1]{0}', space=sflag, size = 0x4, scoped, tag = 'scoped memory for tpu_custom_call.1']
    #allocation5 [shape = 's32[1]{0}', space=sflag, size = 0x4, scoped, tag = 'scoped memory for tpu_custom_call.1']
    #allocation6 [shape = 'u8[65536]{0}', space=vmem, size = 0x10000, scoped, tag = 'input window, operand 1, single buffered']
    #allocation7 [shape = 's32[1]{0}', space=sflag, size = 0x4, scoped, tag = 'scoped memory for tpu_custom_call.1']
    #allocation8 [shape = 'u8[8192]{0}', space=vmem, size = 0x2000, scoped, tag = 'input window, operand 2, single buffered']
    #allocation9 [shape = 'u8[65536]{0}', space=vmem, size = 0x10000, scoped, tag = 'input window, operand 3, single buffered']
    #allocation10 [shape = 's32[1]{0}', space=sflag, size = 0x4, scoped, tag = 'scoped memory for tpu_custom_call.1']
    #allocation11 [shape = 'u8[8192]{0}', space=vmem, size = 0x2000, scoped, tag = 'output window, operand 0, single buffered']
    %10 = vsyncpa [#allocation4], 0
    %11 = vsyncpa [#allocation7], 0
    %12 = vsyncpa [#allocation10], 0
    %13 = vsyncpa [#allocation5], 0
    // Predicated region
    $region2: #{tpu_custom_call.1} parent=1 // pred_check
      _
    $region3: #{tpu_custom_call.1} parent=1 // pred_check_branch
      %15 = sbr.rel (0) target = $region5
    $region4: #{tpu_custom_call.1} parent=1 // pred_region
      %s17 = ssub.s32 256, 256
      %18 = vsyncadd [#allocation4], %s17
      %s19 = sshll.u32 [#allocation3], 4
      %s20 = int_to_ptr.vmem [resolvable:$true] %s19
      %25 = dma.hbm_to_vmem [thread:$0]  %s0, 256, %s20, [#allocation4], 128, 128, 8
    $region5: #{tpu_custom_call.1} parent=1 // pred_fallthru
      _
    // Predicated region
    $region6: #{tpu_custom_call.1} parent=1 // pred_check
      _
    $region7: #{tpu_custom_call.1} parent=1 // pred_check_branch
      %27 = sbr.rel (0) target = $region9
    $region8: #{tpu_custom_call.1} parent=1 // pred_region
      %s29 = ssub.s32 2048, 2048
      %30 = vsyncadd [#allocation7], %s29
      %s31 = sshll.u32 [#allocation6], 4
      %s32 = int_to_ptr.vmem [resolvable:$true] %s31
      %37 = dma.hbm_to_vmem [thread:$0]  %s1, 2048, %s32, [#allocation7], 128, 128, 8
    $region9: #{tpu_custom_call.1} parent=1 // pred_fallthru
      _
    // Predicated region
    $region10: #{tpu_custom_call.1} parent=1 // pred_check
      _
    $region11: #{tpu_custom_call.1} parent=1 // pred_check_branch
      %39 = sbr.rel (0) target = $region13
    $region12: #{tpu_custom_call.1} parent=1 // pred_region
      %s41 = ssub.s32 256, 256
      %42 = vsyncadd [#allocation7], %s41
      %s43 = sshll.u32 [#allocation8], 4
      %s44 = int_to_ptr.vmem [resolvable:$true] %s43
      %49 = dma.hbm_to_vmem [thread:$0]  %s2, 256, %s44, [#allocation7], 128, 128, 8
    $region13: #{tpu_custom_call.1} parent=1 // pred_fallthru
      _
    // Predicated region
    $region14: #{tpu_custom_call.1} parent=1 // pred_check
      _
    $region15: #{tpu_custom_call.1} parent=1 // pred_check_branch
      %51 = sbr.rel (0) target = $region17
    $region16: #{tpu_custom_call.1} parent=1 // pred_region
      %s53 = ssub.s32 2048, 2048
      %54 = vsyncadd [#allocation10], %s53
      %s55 = sshll.u32 [#allocation9], 4
      %s56 = int_to_ptr.vmem [resolvable:$true] %s55
      %61 = dma.hbm_to_vmem [thread:$0]  %s3, 2048, %s56, [#allocation10], 128, 128, 8
    $region17: #{tpu_custom_call.1} parent=1 // pred_fallthru
      _
    // Predicated region
    $region18: #{tpu_custom_call.1} parent=1 // pred_check
      _
    $region19: #{tpu_custom_call.1} parent=1 // pred_check_branch
      %63 = sbr.rel (0) target = $region21
    $region20: #{tpu_custom_call.1} parent=1 // pred_region
      _
    $region21: #{tpu_custom_call.1} parent=1 // pred_fallthru
      _
    // Predicated region
    $region22: #{tpu_custom_call.1} parent=1 // pred_check
      _
    $region23: #{tpu_custom_call.1} parent=1 // pred_check_branch
      %65 = sbr.rel (0) target = $region25
    $region24: #{tpu_custom_call.1} parent=1 // pred_region
      %66 = dma.done [#allocation4], 256
    $region25: #{tpu_custom_call.1} parent=1 // pred_fallthru
      _
    // Predicated region
    $region26: #{tpu_custom_call.1} parent=1 // pred_check
      _
    $region27: #{tpu_custom_call.1} parent=1 // pred_check_branch
      %68 = sbr.rel (0) target = $region29
    $region28: #{tpu_custom_call.1} parent=1 // pred_region
      %69 = dma.done [#allocation7], 2048
    $region29: #{tpu_custom_call.1} parent=1 // pred_fallthru
      _
    // Predicated region
    $region30: #{tpu_custom_call.1} parent=1 // pred_check
      _
    $region31: #{tpu_custom_call.1} parent=1 // pred_check_branch
      %71 = sbr.rel (0) target = $region33
    $region32: #{tpu_custom_call.1} parent=1 // pred_region
      %72 = dma.done [#allocation7], 256
    $region33: #{tpu_custom_call.1} parent=1 // pred_fallthru
      _
    // Predicated region
    $region34: #{tpu_custom_call.1} parent=1 // pred_check
      _
    $region35: #{tpu_custom_call.1} parent=1 // pred_check_branch
      %74 = sbr.rel (0) target = $region37
    $region36: #{tpu_custom_call.1} parent=1 // pred_region
      %75 = dma.done [#allocation10], 2048
    $region37: #{tpu_custom_call.1} parent=1 // pred_fallthru
      _
    %p76 = scmp.eq.s32.totalorder 0, 0
    // Predicated region
    $region38: #{tpu_custom_call.1} parent=1 // pred_check
      %p77 = pneg %p76
    $region39: #{tpu_custom_call.1} parent=1 // pred_check_branch
      %79 = sbr.rel (%p77) target = $region41
    $region40: #{tpu_custom_call.1} parent=1 // pred_region
      %80 = vst [vmem:[#allocation2] sm:$0xff] 0.0
      %81 = vst [vmem:[#allocation2 + $0x8] sm:$0xff] 0.0
    $region41: #{tpu_custom_call.1} parent=1 // pred_fallthru
      _
    %v82 = vld [vmem:[#allocation2] sm:$0xff]
    %v83 = vld [vmem:[#allocation2 + $0x8] sm:$0xff]
    %v84 = vld [vmem:[#allocation3] sm:$0xff]
    %v85 = vld [vmem:[#allocation3 + $0x8] sm:$0xff]
    %v86 = vld [vmem:[#allocation6] sm:$0xff]
    %v87 = vld [vmem:[#allocation6 + $0x8] sm:$0xff]
    %v88 = vld [vmem:[#allocation6 + $0x10] sm:$0xff]
    %v89 = vld [vmem:[#allocation6 + $0x18] sm:$0xff]
    %v90 = vld [vmem:[#allocation6 + $0x20] sm:$0xff]
    %v91 = vld [vmem:[#allocation6 + $0x28] sm:$0xff]
    %v92 = vld [vmem:[#allocation6 + $0x30] sm:$0xff]
    %v93 = vld [vmem:[#allocation6 + $0x38] sm:$0xff]
    %v94 = vld [vmem:[#allocation6 + $0x40] sm:$0xff]
    %v95 = vld [vmem:[#allocation6 + $0x48] sm:$0xff]
    %v96 = vld [vmem:[#allocation6 + $0x50] sm:$0xff]
    %v97 = vld [vmem:[#allocation6 + $0x58] sm:$0xff]
    %v98 = vld [vmem:[#allocation6 + $0x60] sm:$0xff]
    %v99 = vld [vmem:[#allocation6 + $0x68] sm:$0xff]
    %v100 = vld [vmem:[#allocation6 + $0x70] sm:$0xff]
    %v101 = vld [vmem:[#allocation6 + $0x78] sm:$0xff]
    %102 = vmatprep.subr.mxu0 0.0
    %103 = vmatpush1.xpose.msra.mxu0 %v86
    %104 = vmatprep.subr.mxu0 0.0
    %105 = vmatpush1.xpose.msra.mxu0 %v87
    %106 = vmatprep.subr.mxu0 0.0
    %107 = vmatpush1.xpose.msra.mxu0 %v88
    %108 = vmatprep.subr.mxu0 0.0
    %109 = vmatpush1.xpose.msra.mxu0 %v89
    %110 = vmatprep.subr.mxu0 0.0
    %111 = vmatpush1.xpose.msra.mxu0 %v90
    %112 = vmatprep.subr.mxu0 0.0
    %113 = vmatpush1.xpose.msra.mxu0 %v91
    %114 = vmatprep.subr.mxu0 0.0
    %115 = vmatpush1.xpose.msra.mxu0 %v92
    %116 = vmatprep.subr.mxu0 0.0
    %117 = vmatpush1.xpose.msra.mxu0 %v93
    %118 = vmatprep.subr.mxu0 0.0
    %119 = vmatpush1.xpose.msra.mxu0 %v94
    %120 = vmatprep.subr.mxu0 0.0
    %121 = vmatpush1.xpose.msra.mxu0 %v95
    %122 = vmatprep.subr.mxu0 0.0
    %123 = vmatpush1.xpose.msra.mxu0 %v96
    %124 = vmatprep.subr.mxu0 0.0
    %125 = vmatpush1.xpose.msra.mxu0 %v97
    %126 = vmatprep.subr.mxu0 0.0
    %127 = vmatpush1.xpose.msra.mxu0 %v98
    %128 = vmatprep.subr.mxu0 0.0
    %129 = vmatpush1.xpose.msra.mxu0 %v99
    %130 = vmatprep.subr.mxu0 0.0
    %131 = vmatpush1.xpose.msra.mxu0 %v100
    %132 = vmatprep.subr.mxu0 0.0
    %133 = vmatpush1.xpose.msra.mxu0 %v101
    %134 = vmatprep.subr.mxu0 0.0
    %135 = vmatpush1.xpose.msra.mxu0 0.0
    %136 = vmatprep.subr.mxu0 0.0
    %137 = vmatpush1.xpose.msra.mxu0 0.0
    %138 = vmatprep.subr.mxu0 0.0
    %139 = vmatpush1.xpose.msra.mxu0 0.0
    %140 = vmatprep.subr.mxu0 0.0
    %141 = vmatpush1.xpose.msra.mxu0 0.0
    %142 = vmatprep.subr.mxu0 0.0
    %143 = vmatpush1.xpose.msra.mxu0 0.0
    %144 = vmatprep.subr.mxu0 0.0
    %145 = vmatpush1.xpose.msra.mxu0 0.0
    %146 = vmatprep.subr.mxu0 0.0
    %147 = vmatpush1.xpose.msra.mxu0 0.0
    %148 = vmatprep.subr.mxu0 0.0
    %149 = vmatpush1.xpose.msra.mxu0 0.0
    %150 = vmatprep.subr.mxu0 0.0
    %151 = vmatpush1.xpose.msra.mxu0 0.0
    %152 = vmatprep.subr.mxu0 0.0
    %153 = vmatpush1.xpose.msra.mxu0 0.0
    %154 = vmatprep.subr.mxu0 0.0
    %155 = vmatpush1.xpose.msra.mxu0 0.0
    %156 = vmatprep.subr.mxu0 0.0
    %157 = vmatpush1.xpose.msra.mxu0 0.0
    %158 = vmatprep.subr.mxu0 0.0
    %159 = vmatpush1.xpose.msra.mxu0 0.0
    %160 = vmatprep.subr.mxu0 0.0
    %161 = vmatpush1.xpose.msra.mxu0 0.0
    %162 = vmatprep.subr.mxu0 0.0
    %163 = vmatpush1.xpose.msra.mxu0 0.0
    %164 = vmatprep.subr.mxu0 0.0
    %165 = vmatpush1.xpose.msra.mxu0 0.0
    %166 = vmatprep.mubr.f32.mxu0 0.0
    %167 = vmatmul.mubr.f32.gmra.mrb[0].mxu0 %v84
    %v168 = vpop.f32.mrb[0].mxu0
    %v169 = vadd.f32 0.0, %v168
    %v170 = vpop.f32.mrb[0].mxu0
    %171 = vmatprep.mubr.f32.mxu0 0.0
    %172 = vmatmul.mubr.f32.gmra.mrb[0].mxu0 %v85
    %v173 = vpop.f32.mrb[0].mxu0
    %v174 = vadd.f32 0.0, %v173
    %v175 = vpop.f32.mrb[0].mxu0
    %176 = vdwg.mxu0
    %v177 = vadd.f32 %v82, %v169
    %v178 = vadd.f32 %v83, %v174
    %179 = vst [vmem:[#allocation2] sm:$0xff] %v177
    %180 = vst [vmem:[#allocation2 + $0x8] sm:$0xff] %v178
    // Predicated region
    $region42: #{tpu_custom_call.1} parent=1 // pred_check
      %p181 = pneg %p76
    $region43: #{tpu_custom_call.1} parent=1 // pred_check_branch
      %183 = sbr.rel (%p181) target = $region45
    $region44: #{tpu_custom_call.1} parent=1 // pred_region
      %v184 = vld [vmem:[#allocation8] sm:$0xff]
      %v185 = vld [vmem:[#allocation8 + $0x8] sm:$0xff]
      %v186 = vld [vmem:[#allocation9] sm:$0xff]
      %v187 = vld [vmem:[#allocation9 + $0x8] sm:$0xff]
      %v188 = vld [vmem:[#allocation9 + $0x10] sm:$0xff]
      %v189 = vld [vmem:[#allocation9 + $0x18] sm:$0xff]
      %v190 = vld [vmem:[#allocation9 + $0x20] sm:$0xff]
      %v191 = vld [vmem:[#allocation9 + $0x28] sm:$0xff]
      %v192 = vld [vmem:[#allocation9 + $0x30] sm:$0xff]
      %v193 = vld [vmem:[#allocation9 + $0x38] sm:$0xff]
      %v194 = vld [vmem:[#allocation9 + $0x40] sm:$0xff]
      %v195 = vld [vmem:[#allocation9 + $0x48] sm:$0xff]
      %v196 = vld [vmem:[#allocation9 + $0x50] sm:$0xff]
      %v197 = vld [vmem:[#allocation9 + $0x58] sm:$0xff]
      %v198 = vld [vmem:[#allocation9 + $0x60] sm:$0xff]
      %v199 = vld [vmem:[#allocation9 + $0x68] sm:$0xff]
      %v200 = vld [vmem:[#allocation9 + $0x70] sm:$0xff]
      %v201 = vld [vmem:[#allocation9 + $0x78] sm:$0xff]
      %202 = vmatprep.subr.mxu0 0.0
      %203 = vmatpush1.xpose.msra.mxu0 %v186
      %204 = vmatprep.subr.mxu0 0.0
      %205 = vmatpush1.xpose.msra.mxu0 %v187
      %206 = vmatprep.subr.mxu0 0.0
      %207 = vmatpush1.xpose.msra.mxu0 %v188
      %208 = vmatprep.subr.mxu0 0.0
      %209 = vmatpush1.xpose.msra.mxu0 %v189
      %210 = vmatprep.subr.mxu0 0.0
      %211 = vmatpush1.xpose.msra.mxu0 %v190
      %212 = vmatprep.subr.mxu0 0.0
      %213 = vmatpush1.xpose.msra.mxu0 %v191
      %214 = vmatprep.subr.mxu0 0.0
      %215 = vmatpush1.xpose.msra.mxu0 %v192
      %216 = vmatprep.subr.mxu0 0.0
      %217 = vmatpush1.xpose.msra.mxu0 %v193
      %218 = vmatprep.subr.mxu0 0.0
      %219 = vmatpush1.xpose.msra.mxu0 %v194
      %220 = vmatprep.subr.mxu0 0.0
      %221 = vmatpush1.xpose.msra.mxu0 %v195
      %222 = vmatprep.subr.mxu0 0.0
      %223 = vmatpush1.xpose.msra.mxu0 %v196
      %224 = vmatprep.subr.mxu0 0.0
      %225 = vmatpush1.xpose.msra.mxu0 %v197
      %226 = vmatprep.subr.mxu0 0.0
      %227 = vmatpush1.xpose.msra.mxu0 %v198
      %228 = vmatprep.subr.mxu0 0.0
      %229 = vmatpush1.xpose.msra.mxu0 %v199
      %230 = vmatprep.subr.mxu0 0.0
      %231 = vmatpush1.xpose.msra.mxu0 %v200
      %232 = vmatprep.subr.mxu0 0.0
      %233 = vmatpush1.xpose.msra.mxu0 %v201
      %234 = vmatprep.subr.mxu0 0.0
      %235 = vmatpush1.xpose.msra.mxu0 0.0
      %236 = vmatprep.subr.mxu0 0.0
      %237 = vmatpush1.xpose.msra.mxu0 0.0
      %238 = vmatprep.subr.mxu0 0.0
      %239 = vmatpush1.xpose.msra.mxu0 0.0
      %240 = vmatprep.subr.mxu0 0.0
      %241 = vmatpush1.xpose.msra.mxu0 0.0
      %242 = vmatprep.subr.mxu0 0.0
      %243 = vmatpush1.xpose.msra.mxu0 0.0
      %244 = vmatprep.subr.mxu0 0.0
      %245 = vmatpush1.xpose.msra.mxu0 0.0
      %246 = vmatprep.subr.mxu0 0.0
      %247 = vmatpush1.xpose.msra.mxu0 0.0
      %248 = vmatprep.subr.mxu0 0.0
      %249 = vmatpush1.xpose.msra.mxu0 0.0
      %250 = vmatprep.subr.mxu0 0.0
      %251 = vmatpush1.xpose.msra.mxu0 0.0
      %252 = vmatprep.subr.mxu0 0.0
      %253 = vmatpush1.xpose.msra.mxu0 0.0
      %254 = vmatprep.subr.mxu0 0.0
      %255 = vmatpush1.xpose.msra.mxu0 0.0
      %256 = vmatprep.subr.mxu0 0.0
      %257 = vmatpush1.xpose.msra.mxu0 0.0
      %258 = vmatprep.subr.mxu0 0.0
      %259 = vmatpush1.xpose.msra.mxu0 0.0
      %260 = vmatprep.subr.mxu0 0.0
      %261 = vmatpush1.xpose.msra.mxu0 0.0
      %262 = vmatprep.subr.mxu0 0.0
      %263 = vmatpush1.xpose.msra.mxu0 0.0
      %264 = vmatprep.subr.mxu0 0.0
      %265 = vmatpush1.xpose.msra.mxu0 0.0
      %266 = vmatprep.mubr.f32.mxu0 0.0
      %267 = vmatmul.mubr.f32.gmra.mrb[0].mxu0 %v184
      %v268 = vpop.f32.mrb[0].mxu0
      %v269 = vadd.f32 0.0, %v268
      %v270 = vpop.f32.mrb[0].mxu0
      %271 = vmatprep.mubr.f32.mxu0 0.0
      %272 = vmatmul.mubr.f32.gmra.mrb[0].mxu0 %v185
      %v273 = vpop.f32.mrb[0].mxu0
      %v274 = vadd.f32 0.0, %v273
      %v275 = vpop.f32.mrb[0].mxu0
      %276 = vdwg.mxu0
      %v277 = vld [vmem:[#allocation2] sm:$0xff]
      %v278 = vld [vmem:[#allocation2 + $0x8] sm:$0xff]
      %v279 = vmul.f32 %v269, 4.0
      %v280 = vmul.f32 %v274, 4.0
      %v281 = vadd.f32 %v277, %v279
      %v282 = vadd.f32 %v278, %v280
      %v283 = vld [vmem:[%s4] sm:$0x1]
      %v285 = vlaneseq
      %v286 = vshrl.u32 %v285, 7
      %v287 = vsub.s32 0, %v286
      %v288 = vrot.slane %v283, %v287
      %v290 = vadd.f32 %v281, %v288
      %v291 = vadd.f32 %v282, %v288
      %292 = vst [vmem:[#allocation11] sm:$0xff] %v290
      %293 = vst [vmem:[#allocation11 + $0x8] sm:$0xff] %v291
    $region45: #{tpu_custom_call.1} parent=1 // pred_fallthru
      _
    // Predicated region
    $region46: #{tpu_custom_call.1} parent=1 // pred_check
      _
    $region47: #{tpu_custom_call.1} parent=1 // pred_check_branch
      %295 = sbr.rel (0) target = $region49
    $region48: #{tpu_custom_call.1} parent=1 // pred_region
      %s297 = ssub.s32 256, 256
      %298 = vsyncadd [#allocation5], %s297
      %s299 = sshll.u32 [#allocation11], 4
      %s300 = int_to_ptr.vmem [resolvable:$true] %s299
      %305 = dma.vmem_to_hbm [thread:$0]  %s300, 256, %s5, [#allocation5], 128, 128, 8
    $region49: #{tpu_custom_call.1} parent=1 // pred_fallthru
      _
    // Predicated region
    $region50: #{tpu_custom_call.1} parent=1 // pred_check
      _
    $region51: #{tpu_custom_call.1} parent=1 // pred_check_branch
      %307 = sbr.rel (0) target = $region53
    $region52: #{tpu_custom_call.1} parent=1 // pred_region
      %308 = dma.done [#allocation5], 256
    $region53: #{tpu_custom_call.1} parent=1 // pred_fallthru
      _
    %309 = vsyncpa [#allocation4], 1
    %310 = vsyncpa [#allocation7], 1
    %311 = vsyncpa [#allocation10], 1
    %312 = vsyncpa [#allocation5], 1

</llo_original>
